<compile_context>
chip_gen: v5e
topology: v5e:2x2
jax: 0.10.0
libtpu: 0.0.40
codegen_flags: <defaults>
</compile_context>

<pallas_src>
import functools

import jax
import jax.numpy as jnp
from jax import lax
from jax.experimental import pallas as pl
from jax.experimental.pallas import tpu as pltpu

_LANES = 128          # logical rows packed per lane-dense super-row
_MAX_CLASSES = 512    # past this a super-row gets unwieldy; fall back to plain jnp


def _varsum_kernel(x_ref, seg_ref, o_ref, *, inv_c, n_super, block_super, needs_mask):
    """Sum of per-logical-row biased variances for this block of super-rows.

    x_ref:   (block_super, 128*C)  lane-dense packed logits
    seg_ref: (128*C, 128)          block-diagonal ones (segmented-sum matrix)
    o_ref:   (1, 8, 128)           partial written to sub-row 0 (rest zero-padded)
    """
    x = x_ref[...].astype(jnp.float32)                                # f32 accumulation
    seg = seg_ref[...]
    # Segmented (per logical row) sums on the MXU.
    s1 = jnp.dot(x, seg, preferred_element_type=jnp.float32)          # (B, 128) sum x
    s2 = jnp.dot(x * x, seg, preferred_element_type=jnp.float32)      # (B, 128) sum x^2
    mean = s1 * inv_c
    var = jnp.maximum(s2 * inv_c - mean * mean, 0.0)                  # biased var, >= 0

    def _emit(v):
        part = jnp.sum(v, axis=0, keepdims=True)[None]                # (1, 1, 128)
        sub = lax.broadcasted_iota(jnp.int32, o_ref.shape, 1)
        o_ref[...] = jnp.where(sub == 0, part, 0.0)                   # full (8,128) tile

    if needs_mask:
        i = pl.program_id(0)
        is_last = i == pl.num_programs(0) - 1

        @pl.when(jnp.logical_not(is_last))
        def _full_block():
            _emit(var)

        @pl.when(is_last)
        def _partial_block():
            # Only the final block can contain garbage (OOB) super-rows; mask the
            # per-row variances (never the accumulated sum) before reducing.
            srow = lax.broadcasted_iota(jnp.int32, var.shape, 0)
            _emit(jnp.where(srow < n_super - i * block_super, var, 0.0))
    else:
        _emit(var)


def _vmem_capacity_bytes():
    """Physical VMEM of the local TPU (v5e/v6e: 128 MiB, v7x: 64 MiB)."""
    try:
        info = pltpu.get_tpu_info()
        for attr in ("vmem_capacity_bytes", "vmem_bytes", "vmem_size_bytes"):
            val = getattr(info, attr, None)
            if val:
                return int(val)
    except Exception:
        pass
    return 64 * 1024 * 1024   # conservative (v7x) default


def my_loss(inputs, target=None, *, block_super=None):
    """loss = -mean_over_rows(var(inputs, axis=1, biased)).  `target` is unused."""
    del target   # parity with MyLoss.forward(input, target); never read.
    n, c = inputs.shape
    r = _LANES
    w = c * r
    n_super = n // r
    n_main = n_super * r
    use_kernel = n_super > 0 and c <= _MAX_CLASSES

    total = jnp.float32(0.0)

    if use_kernel:
        # Lane-dense view: 128 consecutive logical rows packed per super-row.
        x_main = inputs if n_main == n else inputs[:n_main]
        x_main = x_main.reshape(n_super, w)

        # Block-diagonal ones matrix: lane j belongs to logical row j // c.
        seg = (jnp.arange(w, dtype=jnp.int32)[:, None] // c ==
               jnp.arange(r, dtype=jnp.int32)[None, :]).astype(jnp.float32)

        # Per-generation VMEM budget (keep v7x under its 64 MiB capacity).
        vmem_limit = int(min(96 * 1024 * 1024,
                             max(32 * 1024 * 1024, _vmem_capacity_bytes() // 2)))
        if block_super is None:
            # Double-buffered input + f32 temporaries + seg must fit in the budget.
            block_super = max(8, (vmem_limit // 8) // (w * 4))
            block_super = min(block_super, 4096)

        # Sublane packing granularity: 8 rows (f32), 16 (bf16), 32 (int8/fp8).
        sub = {4: 8, 2: 16, 1: 32}.get(inputs.dtype.itemsize, 8)
        if block_super >= n_super:
            block_super = n_super                     # single full-extent block
        else:
            block_super = max(sub, (block_super // sub) * sub)
            block_super = min(block_super, n_super)

        num_blocks = pl.cdiv(n_super, block_super)
        needs_mask = (n_super % block_super) != 0

        kernel = functools.partial(
            _varsum_kernel,
            inv_c=float(1.0 / c),
            n_super=n_super,
            block_super=block_super,
            needs_mask=needs_mask,
        )

        partials = pl.pallas_call(
            kernel,
            out_shape=jax.ShapeDtypeStruct((num_blocks, 8, r), jnp.float32),
            grid=(num_blocks,),
            in_specs=[
                pl.BlockSpec((block_super, w), lambda i: (i, 0)),
                pl.BlockSpec((w, r), lambda i: (0, 0)),   # constant block: fetched once
            ],
            out_specs=pl.BlockSpec((1, 8, r), lambda i: (i, 0, 0)),
            compiler_params=pltpu.CompilerParams(
                dimension_semantics=("parallel",),        # no carried state -> megacore
                vmem_limit_bytes=vmem_limit,
            ),
        )(x_main, seg)
        total = total + jnp.sum(partials)
        rest = None if n_main == n else inputs[n_main:]
    else:
        # Tiny batches (< 128 rows) or absurdly wide class dims: plain jnp is at least
        # as fast as a kernel launch, and the math is identical.
        rest = inputs

    if rest is not None:
        tail = rest.astype(jnp.float32)
        tmean = jnp.mean(tail, axis=1, keepdims=True)
        total = total + jnp.sum(jnp.mean((tail - tmean) ** 2, axis=1))

    return (-(total / n)).astype(inputs.dtype)


def my_loss_ref(inputs):
    # Pure-JAX reference: same math as torch.var_mean(..., unbiased=False).
    return -jnp.mean(jnp.var(inputs.astype(jnp.float32), axis=1, ddof=0))


if __name__ == "__main__":
    key = jax.random.PRNGKey(0)
    k1, k2, k3, k4 = jax.random.split(key, 4)
    C = 10  # CIFAR10 classes

    loss_fn = jax.jit(my_loss, static_argnames=("block_super",))

    # 1) PGD-style batch, multiple of 128 rows: single lane-dense kernel block.
    N1 = 2176
    x1 = jax.random.normal(k1, (N1, C), dtype=jnp.float32)
    t1 = jax.random.randint(k2, (N1,), 0, C, dtype=jnp.int32)   # unused (API parity)
    out1 = loss_fn(x1, t1)
    jax.block_until_ready(out1)
    ref1 = my_loss_ref(x1)
    assert jnp.allclose(out1, ref1, atol=1e-5, rtol=1e-5), (out1, ref1)

    # 2) Forced small blocks: multi-block grid + partial last block (mask path).
    out2 = loss_fn(x1, None, block_super=8)
    jax.block_until_ready(out2)
    assert jnp.allclose(out2, ref1, atol=1e-5, rtol=1e-5), (out2, ref1)

    # 3) Ragged batch (not a multiple of 128): kernel main part + tiny jnp tail.
    N3 = 2085
    x3 = jax.random.normal(k3, (N3, C), dtype=jnp.float32)
    out3 = loss_fn(x3, None)
    jax.block_until_ready(out3)
    ref3 = my_loss_ref(x3)
    assert jnp.allclose(out3, ref3, atol=1e-5, rtol=1e-5), (out3, ref3)

    # 4) bf16 logits (halves HBM bytes on the bandwidth-bound path); f32 accumulation.
    x4 = jax.random.normal(k4, (256, C), dtype=jnp.float32).astype(jnp.bfloat16)
    out4 = loss_fn(x4, None)
    jax.block_until_ready(out4)
    ref4 = my_loss_ref(x4.astype(jnp.float32))
    assert jnp.allclose(out4.astype(jnp.float32), ref4, atol=2e-2, rtol=2e-2), (out4, ref4)

    print("KERNEL_OK")
</pallas_src>

<mosaic_0001>
module attributes {stable_mosaic.version = 11 : i64} {
  func.func @_varsum_kernel(%arg0: i32, %arg1: memref<17x1280xf32, #tpu.memory_space<vmem>>, %arg2: memref<1280x128xf32, #tpu.memory_space<vmem>>, %arg3: memref<1x8x128xf32, #tpu.memory_space<vmem>>) attributes {dimension_semantics = [#tpu.dimension_semantics<parallel>], iteration_bounds = array<i64: 1>, scalar_prefetch = 0 : i64, scratch_operands = 0 : i64, tpu.core_type = #tpu.core_type<tc>, window_params = [{transform_indices = @transform_0, window_bounds = array<i64: 17, 1280>}, {pipeline_mode = #tpu.pipeline_mode<synchronous>, transform_indices = @transform_1, window_bounds = array<i64: 1280, 128>}, {transform_indices = @transform_2, window_bounds = array<i64: 1, 8, 128>}]} {
    %c0 = arith.constant 0 : index
    %c0_0 = arith.constant 0 : index
    %0 = vector.load %arg1[%c0, %c0_0] : memref<17x1280xf32, #tpu.memory_space<vmem>>, vector<17x1280xf32>
    %c0_1 = arith.constant 0 : index
    %c0_2 = arith.constant 0 : index
    %1 = vector.load %arg2[%c0_1, %c0_2] : memref<1280x128xf32, #tpu.memory_space<vmem>>, vector<1280x128xf32>
    %cst = arith.constant dense<0.000000e+00> : vector<17x128xf32>
    %2 = tpu.matmul %0, %1, %cst {dimension_numbers = #tpu.dot_dimension_numbers<[1], [0], [0], [1], [0, 0, 1, 1], [], []>} : vector<17x1280xf32>, vector<1280x128xf32>, vector<17x128xf32> -> vector<17x128xf32>
    %3 = arith.mulf %0, %0 : vector<17x1280xf32>
    %cst_3 = arith.constant dense<0.000000e+00> : vector<17x128xf32>
    %4 = tpu.matmul %3, %1, %cst_3 {dimension_numbers = #tpu.dot_dimension_numbers<[1], [0], [0], [1], [0, 0, 1, 1], [], []>} : vector<17x1280xf32>, vector<1280x128xf32>, vector<17x128xf32> -> vector<17x128xf32>
    %cst_4 = arith.constant 1.000000e-01 : f32
    %5 = vector.broadcast %cst_4 : f32 to vector<17x128xf32>
    %6 = arith.mulf %2, %5 : vector<17x128xf32>
    %cst_5 = arith.constant 1.000000e-01 : f32
    %7 = vector.broadcast %cst_5 : f32 to vector<17x128xf32>
    %8 = arith.mulf %4, %7 : vector<17x128xf32>
    %9 = arith.mulf %6, %6 : vector<17x128xf32>
    %10 = arith.subf %8, %9 : vector<17x128xf32>
    %cst_6 = arith.constant 0.000000e+00 : f32
    %11 = vector.broadcast %cst_6 : f32 to vector<17x128xf32>
    %12 = arith.maximumf %10, %11 : vector<17x128xf32>
    %cst_7 = arith.constant dense<0.000000e+00> : vector<128xf32>
    %13 = vector.multi_reduction <add>, %12, %cst_7 [0] : vector<17x128xf32> to vector<128xf32>
    %14 = vector.shape_cast %13 : vector<128xf32> to vector<1x128xf32>
    %15 = vector.shape_cast %14 : vector<1x128xf32> to vector<1x1x128xf32>
    %16 = tpu.iota {dimensions = array<i32: 1>} : vector<1x8x128xi32>
    %c0_i32 = arith.constant 0 : i32
    %17 = vector.broadcast %c0_i32 : i32 to vector<1x8x128xi32>
    %18 = arith.cmpi eq, %16, %17 : vector<1x8x128xi32>
    %cst_8 = arith.constant 0.000000e+00 : f32
    %19 = vector.shape_cast %15 : vector<1x1x128xf32> to vector<1x1x128xf32>
    %20 = vector.broadcast %19 : vector<1x1x128xf32> to vector<1x8x128xf32>
    %21 = vector.broadcast %cst_8 : f32 to vector<1x8x128xf32>
    %22 = arith.select %18, %20, %21 : vector<1x8x128xi1>, vector<1x8x128xf32>
    %c0_9 = arith.constant 0 : index
    %c0_10 = arith.constant 0 : index
    %c0_11 = arith.constant 0 : index
    %23 = vector.load %arg3[%c0_9, %c0_10, %c0_11] : memref<1x8x128xf32, #tpu.memory_space<vmem>>, vector<1x8x128xf32>
    tpu.vector_store %arg3[%c0_9, %c0_10, %c0_11], %22 {strides = array<i32>} : memref<1x8x128xf32, #tpu.memory_space<vmem>>, vector<1x8x128xf32>,
    return
  }
  func.func @transform_0(%arg0: i32) -> (i32, i32) {
    %c0_i32 = arith.constant 0 : i32
    %c0_i32_0 = arith.constant 0 : i32
    return %arg0, %c0_i32 : i32, i32
  }
  func.func @transform_1(%arg0: i32) -> (i32, i32) {
    %c0_i32 = arith.constant 0 : i32
    %c0_i32_0 = arith.constant 0 : i32
    %c0_i32_1 = arith.constant 0 : i32
    return %c0_i32, %c0_i32_0 : i32, i32
  }
  func.func @transform_2(%arg0: i32) -> (i32, i32, i32) {
    %c0_i32 = arith.constant 0 : i32
    %c0_i32_0 = arith.constant 0 : i32
    %c0_i32_1 = arith.constant 0 : i32
    return %arg0, %c0_i32, %c0_i32_0 : i32, i32, i32
  }
}

</mosaic_0001>

<llo_original>
// kernel: my_loss.1
$region0: #{my_loss.1}
  #allocation0 [shape = 'u32[]', space=smem, size = 0x4, offset = 0x4, fixed_abs, tag = 'smem constant byte address 0x4 - core index']
  #allocation1 [shape = 'u32[72,128]{1,0:T(1,128)}', space=vmem, size = 0x9000, scoped, tag = 'internal scratch']
  %s0 = inlined_call_operand.vmem [shape: f32[17,1280], index: 0, kind: input, shape index: {}]
  %s1 = inlined_call_operand.vmem [shape: f32[1280,128], index: 1, kind: input, shape index: {}]
  %s2 = inlined_call_operand.vmem [shape: f32[1,8,128], index: 2, kind: output, shape index: {}]
  %s3 = sld [smem:[#allocation0]]
  $region18: #{my_loss.1} parent=0
    _
  %s5 = ssub.s32 1, %s3
  %s6 = scalar_select 0, %s5, %s3
  // Predicated region
  $region2: #{my_loss.1} parent=0 // pred_check
    _
  $region3: #{my_loss.1} parent=0 // pred_check_branch
    %8 = sbr.rel (0) target = $region5
  $region4: #{my_loss.1} parent=0 // pred_region
    _
  $region5: #{my_loss.1} parent=0 // pred_fallthru
    _
  // Predicated region
  $region6: #{my_loss.1} parent=0 // pred_check
    _
  $region7: #{my_loss.1} parent=0 // pred_check_branch
    %10 = sbr.rel (0) target = $region9
  $region8: #{my_loss.1} parent=0 // pred_region
    _
  $region9: #{my_loss.1} parent=0 // pred_fallthru
    _
  %v11 = vld [vmem:[%s0] sm:$0xff]
  %v12 = vld [vmem:[%s0 + $0x8] sm:$0xff]
  %v13 = vld [vmem:[%s0 + $0x10] sm:$0xff]
  %v14 = vld [vmem:[%s0 + $0x18] sm:$0xff]
  %v15 = vld [vmem:[%s0 + $0x20] sm:$0xff]
  %v16 = vld [vmem:[%s0 + $0x28] sm:$0xff]
  %v17 = vld [vmem:[%s0 + $0x30] sm:$0xff]
  %v18 = vld [vmem:[%s0 + $0x38] sm:$0xff]
  %v19 = vld [vmem:[%s0 + $0x40] sm:$0xff]
  %v20 = vld [vmem:[%s0 + $0x48] sm:$0xff]
  %v21 = vld [vmem:[%s0 + $0x50] sm:$0xff]
  %v22 = vld [vmem:[%s0 + $0x58] sm:$0xff]
  %v23 = vld [vmem:[%s0 + $0x60] sm:$0xff]
  %v24 = vld [vmem:[%s0 + $0x68] sm:$0xff]
  %v25 = vld [vmem:[%s0 + $0x70] sm:$0xff]
  %v26 = vld [vmem:[%s0 + $0x78] sm:$0xff]
  %v27 = vld [vmem:[%s0 + $0x80] sm:$0xff]
  %v28 = vld [vmem:[%s0 + $0x88] sm:$0xff]
  %v29 = vld [vmem:[%s0 + $0x90] sm:$0xff]
  %v30 = vld [vmem:[%s0 + $0x98] sm:$0xff]
  %v31 = vld [vmem:[%s0 + $0xa0] sm:$0x1]
  %v32 = vld [vmem:[%s0 + $0xa8] sm:$0x1]
  %v33 = vld [vmem:[%s0 + $0xb0] sm:$0x1]
  %v34 = vld [vmem:[%s0 + $0xb8] sm:$0x1]
  %v35 = vld [vmem:[%s0 + $0xc0] sm:$0x1]
  %v36 = vld [vmem:[%s0 + $0xc8] sm:$0x1]
  %v37 = vld [vmem:[%s0 + $0xd0] sm:$0x1]
  %v38 = vld [vmem:[%s0 + $0xd8] sm:$0x1]
  %v39 = vld [vmem:[%s0 + $0xe0] sm:$0x1]
  %v40 = vld [vmem:[%s0 + $0xe8] sm:$0x1]
  %v41 = vld [vmem:[%s1] sm:$0xff]
  %v42 = vld [vmem:[%s1 + $0x8] sm:$0xff]
  %v43 = vld [vmem:[%s1 + $0x10] sm:$0xff]
  %v44 = vld [vmem:[%s1 + $0x18] sm:$0xff]
  %v45 = vld [vmem:[%s1 + $0x20] sm:$0xff]
  %v46 = vld [vmem:[%s1 + $0x28] sm:$0xff]
  %v47 = vld [vmem:[%s1 + $0x30] sm:$0xff]
  %v48 = vld [vmem:[%s1 + $0x38] sm:$0xff]
  %v49 = vld [vmem:[%s1 + $0x40] sm:$0xff]
  %v50 = vld [vmem:[%s1 + $0x48] sm:$0xff]
  %v51 = vld [vmem:[%s1 + $0x50] sm:$0xff]
  %v52 = vld [vmem:[%s1 + $0x58] sm:$0xff]
  %v53 = vld [vmem:[%s1 + $0x60] sm:$0xff]
  %v54 = vld [vmem:[%s1 + $0x68] sm:$0xff]
  %v55 = vld [vmem:[%s1 + $0x70] sm:$0xff]
  %v56 = vld [vmem:[%s1 + $0x78] sm:$0xff]
  %v57 = vld [vmem:[%s1 + $0x80] sm:$0xff]
  %v58 = vld [vmem:[%s1 + $0x88] sm:$0xff]
  %v59 = vld [vmem:[%s1 + $0x90] sm:$0xff]
  %v60 = vld [vmem:[%s1 + $0x98] sm:$0xff]
  %v61 = vld [vmem:[%s1 + $0xa0] sm:$0xff]
  %v62 = vld [vmem:[%s1 + $0xa8] sm:$0xff]
  %v63 = vld [vmem:[%s1 + $0xb0] sm:$0xff]
  %v64 = vld [vmem:[%s1 + $0xb8] sm:$0xff]
  %v65 = vld [vmem:[%s1 + $0xc0] sm:$0xff]
  %v66 = vld [vmem:[%s1 + $0xc8] sm:$0xff]
  %v67 = vld [vmem:[%s1 + $0xd0] sm:$0xff]
  %v68 = vld [vmem:[%s1 + $0xd8] sm:$0xff]
  %v69 = vld [vmem:[%s1 + $0xe0] sm:$0xff]
  %v70 = vld [vmem:[%s1 + $0xe8] sm:$0xff]
  %v71 = vld [vmem:[%s1 + $0xf0] sm:$0xff]
  %v72 = vld [vmem:[%s1 + $0xf8] sm:$0xff]
  %v73 = vld [vmem:[%s1 + $0x100] sm:$0xff]
  %v74 = vld [vmem:[%s1 + $0x108] sm:$0xff]
  %v75 = vld [vmem:[%s1 + $0x110] sm:$0xff]
  %v76 = vld [vmem:[%s1 + $0x118] sm:$0xff]
  %v77 = vld [vmem:[%s1 + $0x120] sm:$0xff]
  %v78 = vld [vmem:[%s1 + $0x128] sm:$0xff]
  %v79 = vld [vmem:[%s1 + $0x130] sm:$0xff]
  %v80 = vld [vmem:[%s1 + $0x138] sm:$0xff]
  %v81 = vld [vmem:[%s1 + $0x140] sm:$0xff]
  %v82 = vld [vmem:[%s1 + $0x148] sm:$0xff]
  %v83 = vld [vmem:[%s1 + $0x150] sm:$0xff]
  %v84 = vld [vmem:[%s1 + $0x158] sm:$0xff]
  %v85 = vld [vmem:[%s1 + $0x160] sm:$0xff]
  %v86 = vld [vmem:[%s1 + $0x168] sm:$0xff]
  %v87 = vld [vmem:[%s1 + $0x170] sm:$0xff]
  %v88 = vld [vmem:[%s1 + $0x178] sm:$0xff]
  %v89 = vld [vmem:[%s1 + $0x180] sm:$0xff]
  %v90 = vld [vmem:[%s1 + $0x188] sm:$0xff]
  %v91 = vld [vmem:[%s1 + $0x190] sm:$0xff]
  %v92 = vld [vmem:[%s1 + $0x198] sm:$0xff]
  %v93 = vld [vmem:[%s1 + $0x1a0] sm:$0xff]
  %v94 = vld [vmem:[%s1 + $0x1a8] sm:$0xff]
  %v95 = vld [vmem:[%s1 + $0x1b0] sm:$0xff]
  %v96 = vld [vmem:[%s1 + $0x1b8] sm:$0xff]
  %v97 = vld [vmem:[%s1 + $0x1c0] sm:$0xff]
  %v98 = vld [vmem:[%s1 + $0x1c8] sm:$0xff]
  %v99 = vld [vmem:[%s1 + $0x1d0] sm:$0xff]
  %v100 = vld [vmem:[%s1 + $0x1d8] sm:$0xff]
  %v101 = vld [vmem:[%s1 + $0x1e0] sm:$0xff]
  %v102 = vld [vmem:[%s1 + $0x1e8] sm:$0xff]
  %v103 = vld [vmem:[%s1 + $0x1f0] sm:$0xff]
  %v104 = vld [vmem:[%s1 + $0x1f8] sm:$0xff]
  %v105 = vld [vmem:[%s1 + $0x200] sm:$0xff]
  %v106 = vld [vmem:[%s1 + $0x208] sm:$0xff]
  %v107 = vld [vmem:[%s1 + $0x210] sm:$0xff]
  %v108 = vld [vmem:[%s1 + $0x218] sm:$0xff]
  %v109 = vld [vmem:[%s1 + $0x220] sm:$0xff]
  %v110 = vld [vmem:[%s1 + $0x228] sm:$0xff]
  %v111 = vld [vmem:[%s1 + $0x230] sm:$0xff]
  %v112 = vld [vmem:[%s1 + $0x238] sm:$0xff]
  %v113 = vld [vmem:[%s1 + $0x240] sm:$0xff]
  %v114 = vld [vmem:[%s1 + $0x248] sm:$0xff]
  %v115 = vld [vmem:[%s1 + $0x250] sm:$0xff]
  %v116 = vld [vmem:[%s1 + $0x258] sm:$0xff]
  %v117 = vld [vmem:[%s1 + $0x260] sm:$0xff]
  %v118 = vld [vmem:[%s1 + $0x268] sm:$0xff]
  %v119 = vld [vmem:[%s1 + $0x270] sm:$0xff]
  %v120 = vld [vmem:[%s1 + $0x278] sm:$0xff]
  %v121 = vld [vmem:[%s1 + $0x280] sm:$0xff]
  %v122 = vld [vmem:[%s1 + $0x288] sm:$0xff]
  %v123 = vld [vmem:[%s1 + $0x290] sm:$0xff]
  %v124 = vld [vmem:[%s1 + $0x298] sm:$0xff]
  %v125 = vld [vmem:[%s1 + $0x2a0] sm:$0xff]
  %v126 = vld [vmem:[%s1 + $0x2a8] sm:$0xff]
  %v127 = vld [vmem:[%s1 + $0x2b0] sm:$0xff]
  %v128 = vld [vmem:[%s1 + $0x2b8] sm:$0xff]
  %v129 = vld [vmem:[%s1 + $0x2c0] sm:$0xff]
  %v130 = vld [vmem:[%s1 + $0x2c8] sm:$0xff]
  %v131 = vld [vmem:[%s1 + $0x2d0] sm:$0xff]
  %v132 = vld [vmem:[%s1 + $0x2d8] sm:$0xff]
  %v133 = vld [vmem:[%s1 + $0x2e0] sm:$0xff]
  %v134 = vld [vmem:[%s1 + $0x2e8] sm:$0xff]
  %v135 = vld [vmem:[%s1 + $0x2f0] sm:$0xff]
  %v136 = vld [vmem:[%s1 + $0x2f8] sm:$0xff]
  %v137 = vld [vmem:[%s1 + $0x300] sm:$0xff]
  %v138 = vld [vmem:[%s1 + $0x308] sm:$0xff]
  %v139 = vld [vmem:[%s1 + $0x310] sm:$0xff]
  %v140 = vld [vmem:[%s1 + $0x318] sm:$0xff]
  %v141 = vld [vmem:[%s1 + $0x320] sm:$0xff]
  %v142 = vld [vmem:[%s1 + $0x328] sm:$0xff]
  %v143 = vld [vmem:[%s1 + $0x330] sm:$0xff]
  %v144 = vld [vmem:[%s1 + $0x338] sm:$0xff]
  %v145 = vld [vmem:[%s1 + $0x340] sm:$0xff]
  %v146 = vld [vmem:[%s1 + $0x348] sm:$0xff]
  %v147 = vld [vmem:[%s1 + $0x350] sm:$0xff]
  %v148 = vld [vmem:[%s1 + $0x358] sm:$0xff]
  %v149 = vld [vmem:[%s1 + $0x360] sm:$0xff]
  %v150 = vld [vmem:[%s1 + $0x368] sm:$0xff]
  %v151 = vld [vmem:[%s1 + $0x370] sm:$0xff]
  %v152 = vld [vmem:[%s1 + $0x378] sm:$0xff]
  %v153 = vld [vmem:[%s1 + $0x380] sm:$0xff]
  %v154 = vld [vmem:[%s1 + $0x388] sm:$0xff]
  %v155 = vld [vmem:[%s1 + $0x390] sm:$0xff]
  %v156 = vld [vmem:[%s1 + $0x398] sm:$0xff]
  %v157 = vld [vmem:[%s1 + $0x3a0] sm:$0xff]
  %v158 = vld [vmem:[%s1 + $0x3a8] sm:$0xff]
  %v159 = vld [vmem:[%s1 + $0x3b0] sm:$0xff]
  %v160 = vld [vmem:[%s1 + $0x3b8] sm:$0xff]
  %v161 = vld [vmem:[%s1 + $0x3c0] sm:$0xff]
  %v162 = vld [vmem:[%s1 + $0x3c8] sm:$0xff]
  %v163 = vld [vmem:[%s1 + $0x3d0] sm:$0xff]
  %v164 = vld [vmem:[%s1 + $0x3d8] sm:$0xff]
  %v165 = vld [vmem:[%s1 + $0x3e0] sm:$0xff]
  %v166 = vld [vmem:[%s1 + $0x3e8] sm:$0xff]
  %v167 = vld [vmem:[%s1 + $0x3f0] sm:$0xff]
  %v168 = vld [vmem:[%s1 + $0x3f8] sm:$0xff]
  %v169 = vld [vmem:[%s1 + $0x400] sm:$0xff]
  %v170 = vld [vmem:[%s1 + $0x408] sm:$0xff]
  %v171 = vld [vmem:[%s1 + $0x410] sm:$0xff]
  %v172 = vld [vmem:[%s1 + $0x418] sm:$0xff]
  %v173 = vld [vmem:[%s1 + $0x420] sm:$0xff]
  %v174 = vld [vmem:[%s1 + $0x428] sm:$0xff]
  %v175 = vld [vmem:[%s1 + $0x430] sm:$0xff]
  %v176 = vld [vmem:[%s1 + $0x438] sm:$0xff]
  %v177 = vld [vmem:[%s1 + $0x440] sm:$0xff]
  %v178 = vld [vmem:[%s1 + $0x448] sm:$0xff]
  %v179 = vld [vmem:[%s1 + $0x450] sm:$0xff]
  %v180 = vld [vmem:[%s1 + $0x458] sm:$0xff]
  %v181 = vld [vmem:[%s1 + $0x460] sm:$0xff]
  %v182 = vld [vmem:[%s1 + $0x468] sm:$0xff]
  %v183 = vld [vmem:[%s1 + $0x470] sm:$0xff]
  %v184 = vld [vmem:[%s1 + $0x478] sm:$0xff]
  %v185 = vld [vmem:[%s1 + $0x480] sm:$0xff]
  %v186 = vld [vmem:[%s1 + $0x488] sm:$0xff]
  %v187 = vld [vmem:[%s1 + $0x490] sm:$0xff]
  %v188 = vld [vmem:[%s1 + $0x498] sm:$0xff]
  %v189 = vld [vmem:[%s1 + $0x4a0] sm:$0xff]
  %v190 = vld [vmem:[%s1 + $0x4a8] sm:$0xff]
  %v191 = vld [vmem:[%s1 + $0x4b0] sm:$0xff]
  %v192 = vld [vmem:[%s1 + $0x4b8] sm:$0xff]
  %v193 = vld [vmem:[%s1 + $0x4c0] sm:$0xff]
  %v194 = vld [vmem:[%s1 + $0x4c8] sm:$0xff]
  %v195 = vld [vmem:[%s1 + $0x4d0] sm:$0xff]
  %v196 = vld [vmem:[%s1 + $0x4d8] sm:$0xff]
  %v197 = vld [vmem:[%s1 + $0x4e0] sm:$0xff]
  %v198 = vld [vmem:[%s1 + $0x4e8] sm:$0xff]
  %v199 = vld [vmem:[%s1 + $0x4f0] sm:$0xff]
  %v200 = vld [vmem:[%s1 + $0x4f8] sm:$0xff]
  %201 = vmatpush.msra.mxu0 %v56
  %202 = vmatpush.msra.mxu0 %v55
  %203 = vmatpush.msra.mxu0 %v54
  %204 = vmatpush.msra.mxu0 %v53
  %205 = vmatpush.msra.mxu0 %v52
  %206 = vmatpush.msra.mxu0 %v51
  %207 = vmatpush.msra.mxu0 %v50
  %208 = vmatpush.msra.mxu0 %v49
  %209 = vmatpush.msra.mxu0 %v48
  %210 = vmatpush.msra.mxu0 %v47
  %211 = vmatpush.msra.mxu0 %v46
  %212 = vmatpush.msra.mxu0 %v45
  %213 = vmatpush.msra.mxu0 %v44
  %214 = vmatpush.msra.mxu0 %v43
  %215 = vmatpush.msra.mxu0 %v42
  %216 = vmatpush.msra.mxu0 %v41
  %217 = vmatmul.f32.gmra.mxu0 %v11
  %v218 = vpop.f32.mrf.mxu0
  %v219 = vadd.f32 0.0, %v218
  %220 = vmatmul.f32.gmra.mxu0 %v21
  %v221 = vpop.f32.mrf.mxu0
  %v222 = vadd.f32 0.0, %v221
  %223 = vmatmul.f32.gmra.mxu0 %v31
  %v224 = vpop.f32.mrf.mxu0
  %v225 = vadd.f32 0.0, %v224
  %226 = vdwg.mxu0
  %227 = vmatpush.msra.mxu0 %v72
  %228 = vmatpush.msra.mxu0 %v71
  %229 = vmatpush.msra.mxu0 %v70
  %230 = vmatpush.msra.mxu0 %v69
  %231 = vmatpush.msra.mxu0 %v68
  %232 = vmatpush.msra.mxu0 %v67
  %233 = vmatpush.msra.mxu0 %v66
  %234 = vmatpush.msra.mxu0 %v65
  %235 = vmatpush.msra.mxu0 %v64
  %236 = vmatpush.msra.mxu0 %v63
  %237 = vmatpush.msra.mxu0 %v62
  %238 = vmatpush.msra.mxu0 %v61
  %239 = vmatpush.msra.mxu0 %v60
  %240 = vmatpush.msra.mxu0 %v59
  %241 = vmatpush.msra.mxu0 %v58
  %242 = vmatpush.msra.mxu0 %v57
  %243 = vmatmul.f32.gmra.mxu0 %v12
  %v244 = vpop.f32.mrf.mxu0
  %v245 = vadd.f32 %v219, %v244
  %246 = vmatmul.f32.gmra.mxu0 %v22
  %v247 = vpop.f32.mrf.mxu0
  %v248 = vadd.f32 %v222, %v247
  %249 = vmatmul.f32.gmra.mxu0 %v32
  %v250 = vpop.f32.mrf.mxu0
  %v251 = vadd.f32 %v225, %v250
  %252 = vdwg.mxu0
  %253 = vmatpush.msra.mxu0 %v88
  %254 = vmatpush.msra.mxu0 %v87
  %255 = vmatpush.msra.mxu0 %v86
  %256 = vmatpush.msra.mxu0 %v85
  %257 = vmatpush.msra.mxu0 %v84
  %258 = vmatpush.msra.mxu0 %v83
  %259 = vmatpush.msra.mxu0 %v82
  %260 = vmatpush.msra.mxu0 %v81
  %261 = vmatpush.msra.mxu0 %v80
  %262 = vmatpush.msra.mxu0 %v79
  %263 = vmatpush.msra.mxu0 %v78
  %264 = vmatpush.msra.mxu0 %v77
  %265 = vmatpush.msra.mxu0 %v76
  %266 = vmatpush.msra.mxu0 %v75
  %267 = vmatpush.msra.mxu0 %v74
  %268 = vmatpush.msra.mxu0 %v73
  %269 = vmatmul.f32.gmra.mxu0 %v13
  %v270 = vpop.f32.mrf.mxu0
  %v271 = vadd.f32 %v245, %v270
  %272 = vmatmul.f32.gmra.mxu0 %v23
  %v273 = vpop.f32.mrf.mxu0
  %v274 = vadd.f32 %v248, %v273
  %275 = vmatmul.f32.gmra.mxu0 %v33
  %v276 = vpop.f32.mrf.mxu0
  %v277 = vadd.f32 %v251, %v276
  %278 = vdwg.mxu0
  %279 = vmatpush.msra.mxu0 %v104
  %280 = vmatpush.msra.mxu0 %v103
  %281 = vmatpush.msra.mxu0 %v102
  %282 = vmatpush.msra.mxu0 %v101
  %283 = vmatpush.msra.mxu0 %v100
  %284 = vmatpush.msra.mxu0 %v99
  %285 = vmatpush.msra.mxu0 %v98
  %286 = vmatpush.msra.mxu0 %v97
  %287 = vmatpush.msra.mxu0 %v96
  %288 = vmatpush.msra.mxu0 %v95
  %289 = vmatpush.msra.mxu0 %v94
  %290 = vmatpush.msra.mxu0 %v93
  %291 = vmatpush.msra.mxu0 %v92
  %292 = vmatpush.msra.mxu0 %v91
  %293 = vmatpush.msra.mxu0 %v90
  %294 = vmatpush.msra.mxu0 %v89
  %295 = vmatmul.f32.gmra.mxu0 %v14
  %v296 = vpop.f32.mrf.mxu0
  %v297 = vadd.f32 %v271, %v296
  %298 = vmatmul.f32.gmra.mxu0 %v24
  %v299 = vpop.f32.mrf.mxu0
  %v300 = vadd.f32 %v274, %v299
  %301 = vmatmul.f32.gmra.mxu0 %v34
  %v302 = vpop.f32.mrf.mxu0
  %v303 = vadd.f32 %v277, %v302
  %304 = vdwg.mxu0
  %305 = vmatpush.msra.mxu0 %v120
  %306 = vmatpush.msra.mxu0 %v119
  %307 = vmatpush.msra.mxu0 %v118
  %308 = vmatpush.msra.mxu0 %v117
  %309 = vmatpush.msra.mxu0 %v116
  %310 = vmatpush.msra.mxu0 %v115
  %311 = vmatpush.msra.mxu0 %v114
  %312 = vmatpush.msra.mxu0 %v113
  %313 = vmatpush.msra.mxu0 %v112
  %314 = vmatpush.msra.mxu0 %v111
  %315 = vmatpush.msra.mxu0 %v110
  %316 = vmatpush.msra.mxu0 %v109
  %317 = vmatpush.msra.mxu0 %v108
  %318 = vmatpush.msra.mxu0 %v107
  %319 = vmatpush.msra.mxu0 %v106
  %320 = vmatpush.msra.mxu0 %v105
  %321 = vmatmul.f32.gmra.mxu0 %v15
  %v322 = vpop.f32.mrf.mxu0
  %v323 = vadd.f32 %v297, %v322
  %324 = vmatmul.f32.gmra.mxu0 %v25
  %v325 = vpop.f32.mrf.mxu0
  %v326 = vadd.f32 %v300, %v325
  %327 = vmatmul.f32.gmra.mxu0 %v35
  %v328 = vpop.f32.mrf.mxu0
  %v329 = vadd.f32 %v303, %v328
  %330 = vdwg.mxu0
  %331 = vmatpush.msra.mxu0 %v136
  %332 = vmatpush.msra.mxu0 %v135
  %333 = vmatpush.msra.mxu0 %v134
  %334 = vmatpush.msra.mxu0 %v133
  %335 = vmatpush.msra.mxu0 %v132
  %336 = vmatpush.msra.mxu0 %v131
  %337 = vmatpush.msra.mxu0 %v130
  %338 = vmatpush.msra.mxu0 %v129
  %339 = vmatpush.msra.mxu0 %v128
  %340 = vmatpush.msra.mxu0 %v127
  %341 = vmatpush.msra.mxu0 %v126
  %342 = vmatpush.msra.mxu0 %v125
  %343 = vmatpush.msra.mxu0 %v124
  %344 = vmatpush.msra.mxu0 %v123
  %345 = vmatpush.msra.mxu0 %v122
  %346 = vmatpush.msra.mxu0 %v121
  %347 = vmatmul.f32.gmra.mxu0 %v16
  %v348 = vpop.f32.mrf.mxu0
  %v349 = vadd.f32 %v323, %v348
  %350 = vmatmul.f32.gmra.mxu0 %v26
  %v351 = vpop.f32.mrf.mxu0
  %v352 = vadd.f32 %v326, %v351
  %353 = vmatmul.f32.gmra.mxu0 %v36
  %v354 = vpop.f32.mrf.mxu0
  %v355 = vadd.f32 %v329, %v354
  %356 = vdwg.mxu0
  %357 = vmatpush.msra.mxu0 %v152
  %358 = vmatpush.msra.mxu0 %v151
  %359 = vmatpush.msra.mxu0 %v150
  %360 = vmatpush.msra.mxu0 %v149
  %361 = vmatpush.msra.mxu0 %v148
  %362 = vmatpush.msra.mxu0 %v147
  %363 = vmatpush.msra.mxu0 %v146
  %364 = vmatpush.msra.mxu0 %v145
  %365 = vmatpush.msra.mxu0 %v144
  %366 = vmatpush.msra.mxu0 %v143
  %367 = vmatpush.msra.mxu0 %v142
  %368 = vmatpush.msra.mxu0 %v141
  %369 = vmatpush.msra.mxu0 %v140
  %370 = vmatpush.msra.mxu0 %v139
  %371 = vmatpush.msra.mxu0 %v138
  %372 = vmatpush.msra.mxu0 %v137
  %373 = vmatmul.f32.gmra.mxu0 %v17
  %v374 = vpop.f32.mrf.mxu0
  %v375 = vadd.f32 %v349, %v374
  %376 = vmatmul.f32.gmra.mxu0 %v27
  %v377 = vpop.f32.mrf.mxu0
  %v378 = vadd.f32 %v352, %v377
  %379 = vmatmul.f32.gmra.mxu0 %v37
  %v380 = vpop.f32.mrf.mxu0
  %v381 = vadd.f32 %v355, %v380
  %382 = vdwg.mxu0
  %383 = vmatpush.msra.mxu0 %v168
  %384 = vmatpush.msra.mxu0 %v167
  %385 = vmatpush.msra.mxu0 %v166
  %386 = vmatpush.msra.mxu0 %v165
  %387 = vmatpush.msra.mxu0 %v164
  %388 = vmatpush.msra.mxu0 %v163
  %389 = vmatpush.msra.mxu0 %v162
  %390 = vmatpush.msra.mxu0 %v161
  %391 = vmatpush.msra.mxu0 %v160
  %392 = vmatpush.msra.mxu0 %v159
  %393 = vmatpush.msra.mxu0 %v158
  %394 = vmatpush.msra.mxu0 %v157
  %395 = vmatpush.msra.mxu0 %v156
  %396 = vmatpush.msra.mxu0 %v155
  %397 = vmatpush.msra.mxu0 %v154
  %398 = vmatpush.msra.mxu0 %v153
  %399 = vmatmul.f32.gmra.mxu0 %v18
  %v400 = vpop.f32.mrf.mxu0
  %v401 = vadd.f32 %v375, %v400
  %402 = vmatmul.f32.gmra.mxu0 %v28
  %v403 = vpop.f32.mrf.mxu0
  %v404 = vadd.f32 %v378, %v403
  %405 = vmatmul.f32.gmra.mxu0 %v38
  %v406 = vpop.f32.mrf.mxu0
  %v407 = vadd.f32 %v381, %v406
  %408 = vdwg.mxu0
  %409 = vmatpush.msra.mxu0 %v184
  %410 = vmatpush.msra.mxu0 %v183
  %411 = vmatpush.msra.mxu0 %v182
  %412 = vmatpush.msra.mxu0 %v181
  %413 = vmatpush.msra.mxu0 %v180
  %414 = vmatpush.msra.mxu0 %v179
  %415 = vmatpush.msra.mxu0 %v178
  %416 = vmatpush.msra.mxu0 %v177
  %417 = vmatpush.msra.mxu0 %v176
  %418 = vmatpush.msra.mxu0 %v175
  %419 = vmatpush.msra.mxu0 %v174
  %420 = vmatpush.msra.mxu0 %v173
  %421 = vmatpush.msra.mxu0 %v172
  %422 = vmatpush.msra.mxu0 %v171
  %423 = vmatpush.msra.mxu0 %v170
  %424 = vmatpush.msra.mxu0 %v169
  %425 = vmatmul.f32.gmra.mxu0 %v19
  %v426 = vpop.f32.mrf.mxu0
  %v427 = vadd.f32 %v401, %v426
  %428 = vmatmul.f32.gmra.mxu0 %v29
  %v429 = vpop.f32.mrf.mxu0
  %v430 = vadd.f32 %v404, %v429
  %431 = vmatmul.f32.gmra.mxu0 %v39
  %v432 = vpop.f32.mrf.mxu0
  %v433 = vadd.f32 %v407, %v432
  %434 = vdwg.mxu0
  %435 = vmatpush.msra.mxu0 %v200
  %436 = vmatpush.msra.mxu0 %v199
  %437 = vmatpush.msra.mxu0 %v198
  %438 = vmatpush.msra.mxu0 %v197
  %439 = vmatpush.msra.mxu0 %v196
  %440 = vmatpush.msra.mxu0 %v195
  %441 = vmatpush.msra.mxu0 %v194
  %442 = vmatpush.msra.mxu0 %v193
  %443 = vmatpush.msra.mxu0 %v192
  %444 = vmatpush.msra.mxu0 %v191
  %445 = vmatpush.msra.mxu0 %v190
  %446 = vmatpush.msra.mxu0 %v189
  %447 = vmatpush.msra.mxu0 %v188
  %448 = vmatpush.msra.mxu0 %v187
  %449 = vmatpush.msra.mxu0 %v186
  %450 = vmatpush.msra.mxu0 %v185
  %451 = vmatmul.f32.gmra.mxu0 %v20
  %v452 = vpop.f32.mrf.mxu0
  %v453 = vadd.f32 %v427, %v452
  %454 = vmatmul.f32.gmra.mxu0 %v30
  %v455 = vpop.f32.mrf.mxu0
  %v456 = vadd.f32 %v430, %v455
  %457 = vmatmul.f32.gmra.mxu0 %v40
  %v458 = vpop.f32.mrf.mxu0
  %v459 = vadd.f32 %v433, %v458
  %460 = vdwg.mxu0
  %v461 = vmul.f32 %v11, %v11
  %v462 = vmul.f32 %v12, %v12
  %v463 = vmul.f32 %v13, %v13
  %v464 = vmul.f32 %v14, %v14
  %v465 = vmul.f32 %v15, %v15
  %v466 = vmul.f32 %v16, %v16
  %v467 = vmul.f32 %v17, %v17
  %v468 = vmul.f32 %v18, %v18
  %v469 = vmul.f32 %v19, %v19
  %v470 = vmul.f32 %v20, %v20
  %v471 = vmul.f32 %v21, %v21
  %v472 = vmul.f32 %v22, %v22
  %v473 = vmul.f32 %v23, %v23
  %v474 = vmul.f32 %v24, %v24
  %v475 = vmul.f32 %v25, %v25
  %v476 = vmul.f32 %v26, %v26
  %v477 = vmul.f32 %v27, %v27
  %v478 = vmul.f32 %v28, %v28
  %v479 = vmul.f32 %v29, %v29
  %v480 = vmul.f32 %v30, %v30
  %v481 = vmul.f32 %v31, %v31
  %v482 = vmul.f32 %v32, %v32
  %v483 = vmul.f32 %v33, %v33
  %v484 = vmul.f32 %v34, %v34
  %v485 = vmul.f32 %v35, %v35
  %v486 = vmul.f32 %v36, %v36
  %v487 = vmul.f32 %v37, %v37
  %v488 = vmul.f32 %v38, %v38
  %v489 = vmul.f32 %v39, %v39
  %v490 = vmul.f32 %v40, %v40
  %491 = vmatpush.msra.mxu0 %v56
  %492 = vmatpush.msra.mxu0 %v55
  %493 = vmatpush.msra.mxu0 %v54
  %494 = vmatpush.msra.mxu0 %v53
  %495 = vmatpush.msra.mxu0 %v52
  %496 = vmatpush.msra.mxu0 %v51
  %497 = vmatpush.msra.mxu0 %v50
  %498 = vmatpush.msra.mxu0 %v49
  %499 = vmatpush.msra.mxu0 %v48
  %500 = vmatpush.msra.mxu0 %v47
  %501 = vmatpush.msra.mxu0 %v46
  %502 = vmatpush.msra.mxu0 %v45
  %503 = vmatpush.msra.mxu0 %v44
  %504 = vmatpush.msra.mxu0 %v43
  %505 = vmatpush.msra.mxu0 %v42
  %506 = vmatpush.msra.mxu0 %v41
  %507 = vmatmul.f32.gmra.mxu0 %v461
  %v508 = vpop.f32.mrf.mxu0
  %v509 = vadd.f32 0.0, %v508
  %510 = vmatmul.f32.gmra.mxu0 %v471
  %v511 = vpop.f32.mrf.mxu0
  %v512 = vadd.f32 0.0, %v511
  %513 = vmatmul.f32.gmra.mxu0 %v481
  %v514 = vpop.f32.mrf.mxu0
  %v515 = vadd.f32 0.0, %v514
  %516 = vdwg.mxu0
  %517 = vmatpush.msra.mxu0 %v72
  %518 = vmatpush.msra.mxu0 %v71
  %519 = vmatpush.msra.mxu0 %v70
  %520 = vmatpush.msra.mxu0 %v69
  %521 = vmatpush.msra.mxu0 %v68
  %522 = vmatpush.msra.mxu0 %v67
  %523 = vmatpush.msra.mxu0 %v66
  %524 = vmatpush.msra.mxu0 %v65
  %525 = vmatpush.msra.mxu0 %v64
  %526 = vmatpush.msra.mxu0 %v63
  %527 = vmatpush.msra.mxu0 %v62
  %528 = vmatpush.msra.mxu0 %v61
  %529 = vmatpush.msra.mxu0 %v60
  %530 = vmatpush.msra.mxu0 %v59
  %531 = vmatpush.msra.mxu0 %v58
  %532 = vmatpush.msra.mxu0 %v57
  %533 = vmatmul.f32.gmra.mxu0 %v462
  %v534 = vpop.f32.mrf.mxu0
  %v535 = vadd.f32 %v509, %v534
  %536 = vmatmul.f32.gmra.mxu0 %v472
  %v537 = vpop.f32.mrf.mxu0
  %v538 = vadd.f32 %v512, %v537
  %539 = vmatmul.f32.gmra.mxu0 %v482
  %v540 = vpop.f32.mrf.mxu0
  %v541 = vadd.f32 %v515, %v540
  %542 = vdwg.mxu0
  %543 = vmatpush.msra.mxu0 %v88
  %544 = vmatpush.msra.mxu0 %v87
  %545 = vmatpush.msra.mxu0 %v86
  %546 = vmatpush.msra.mxu0 %v85
  %547 = vmatpush.msra.mxu0 %v84
  %548 = vmatpush.msra.mxu0 %v83
  %549 = vmatpush.msra.mxu0 %v82
  %550 = vmatpush.msra.mxu0 %v81
  %551 = vmatpush.msra.mxu0 %v80
  %552 = vmatpush.msra.mxu0 %v79
  %553 = vmatpush.msra.mxu0 %v78
  %554 = vmatpush.msra.mxu0 %v77
  %555 = vmatpush.msra.mxu0 %v76
  %556 = vmatpush.msra.mxu0 %v75
  %557 = vmatpush.msra.mxu0 %v74
  %558 = vmatpush.msra.mxu0 %v73
  %559 = vmatmul.f32.gmra.mxu0 %v463
  %v560 = vpop.f32.mrf.mxu0
  %v561 = vadd.f32 %v535, %v560
  %562 = vmatmul.f32.gmra.mxu0 %v473
  %v563 = vpop.f32.mrf.mxu0
  %v564 = vadd.f32 %v538, %v563
  %565 = vmatmul.f32.gmra.mxu0 %v483
  %v566 = vpop.f32.mrf.mxu0
  %v567 = vadd.f32 %v541, %v566
  %568 = vdwg.mxu0
  %569 = vmatpush.msra.mxu0 %v104
  %570 = vmatpush.msra.mxu0 %v103
  %571 = vmatpush.msra.mxu0 %v102
  %572 = vmatpush.msra.mxu0 %v101
  %573 = vmatpush.msra.mxu0 %v100
  %574 = vmatpush.msra.mxu0 %v99
  %575 = vmatpush.msra.mxu0 %v98
  %576 = vmatpush.msra.mxu0 %v97
  %577 = vmatpush.msra.mxu0 %v96
  %578 = vmatpush.msra.mxu0 %v95
  %579 = vmatpush.msra.mxu0 %v94
  %580 = vmatpush.msra.mxu0 %v93
  %581 = vmatpush.msra.mxu0 %v92
  %582 = vmatpush.msra.mxu0 %v91
  %583 = vmatpush.msra.mxu0 %v90
  %584 = vmatpush.msra.mxu0 %v89
  %585 = vmatmul.f32.gmra.mxu0 %v464
  %v586 = vpop.f32.mrf.mxu0
  %v587 = vadd.f32 %v561, %v586
  %588 = vmatmul.f32.gmra.mxu0 %v474
  %v589 = vpop.f32.mrf.mxu0
  %v590 = vadd.f32 %v564, %v589
  %591 = vmatmul.f32.gmra.mxu0 %v484
  %v592 = vpop.f32.mrf.mxu0
  %v593 = vadd.f32 %v567, %v592
  %594 = vdwg.mxu0
  %595 = vmatpush.msra.mxu0 %v120
  %596 = vmatpush.msra.mxu0 %v119
  %597 = vmatpush.msra.mxu0 %v118
  %598 = vmatpush.msra.mxu0 %v117
  %599 = vmatpush.msra.mxu0 %v116
  %600 = vmatpush.msra.mxu0 %v115
  %601 = vmatpush.msra.mxu0 %v114
  %602 = vmatpush.msra.mxu0 %v113
  %603 = vmatpush.msra.mxu0 %v112
  %604 = vmatpush.msra.mxu0 %v111
  %605 = vmatpush.msra.mxu0 %v110
  %606 = vmatpush.msra.mxu0 %v109
  %607 = vmatpush.msra.mxu0 %v108
  %608 = vmatpush.msra.mxu0 %v107
  %609 = vmatpush.msra.mxu0 %v106
  %610 = vmatpush.msra.mxu0 %v105
  %611 = vmatmul.f32.gmra.mxu0 %v465
  %v612 = vpop.f32.mrf.mxu0
  %v613 = vadd.f32 %v587, %v612
  %614 = vmatmul.f32.gmra.mxu0 %v475
  %v615 = vpop.f32.mrf.mxu0
  %v616 = vadd.f32 %v590, %v615
  %617 = vmatmul.f32.gmra.mxu0 %v485
  %v618 = vpop.f32.mrf.mxu0
  %v619 = vadd.f32 %v593, %v618
  %620 = vdwg.mxu0
  %621 = vmatpush.msra.mxu0 %v136
  %622 = vmatpush.msra.mxu0 %v135
  %623 = vmatpush.msra.mxu0 %v134
  %624 = vmatpush.msra.mxu0 %v133
  %625 = vmatpush.msra.mxu0 %v132
  %626 = vmatpush.msra.mxu0 %v131
  %627 = vmatpush.msra.mxu0 %v130
  %628 = vmatpush.msra.mxu0 %v129
  %629 = vmatpush.msra.mxu0 %v128
  %630 = vmatpush.msra.mxu0 %v127
  %631 = vmatpush.msra.mxu0 %v126
  %632 = vmatpush.msra.mxu0 %v125
  %633 = vmatpush.msra.mxu0 %v124
  %634 = vmatpush.msra.mxu0 %v123
  %635 = vmatpush.msra.mxu0 %v122
  %636 = vmatpush.msra.mxu0 %v121
  %637 = vmatmul.f32.gmra.mxu0 %v466
  %v638 = vpop.f32.mrf.mxu0
  %v639 = vadd.f32 %v613, %v638
  %640 = vmatmul.f32.gmra.mxu0 %v476
  %v641 = vpop.f32.mrf.mxu0
  %v642 = vadd.f32 %v616, %v641
  %643 = vmatmul.f32.gmra.mxu0 %v486
  %v644 = vpop.f32.mrf.mxu0
  %v645 = vadd.f32 %v619, %v644
  %646 = vdwg.mxu0
  %647 = vmatpush.msra.mxu0 %v152
  %648 = vmatpush.msra.mxu0 %v151
  %649 = vmatpush.msra.mxu0 %v150
  %650 = vmatpush.msra.mxu0 %v149
  %651 = vmatpush.msra.mxu0 %v148
  %652 = vmatpush.msra.mxu0 %v147
  %653 = vmatpush.msra.mxu0 %v146
  %654 = vmatpush.msra.mxu0 %v145
  %655 = vmatpush.msra.mxu0 %v144
  %656 = vmatpush.msra.mxu0 %v143
  %657 = vmatpush.msra.mxu0 %v142
  %658 = vmatpush.msra.mxu0 %v141
  %659 = vmatpush.msra.mxu0 %v140
  %660 = vmatpush.msra.mxu0 %v139
  %661 = vmatpush.msra.mxu0 %v138
  %662 = vmatpush.msra.mxu0 %v137
  %663 = vmatmul.f32.gmra.mxu0 %v467
  %v664 = vpop.f32.mrf.mxu0
  %v665 = vadd.f32 %v639, %v664
  %666 = vmatmul.f32.gmra.mxu0 %v477
  %v667 = vpop.f32.mrf.mxu0
  %v668 = vadd.f32 %v642, %v667
  %669 = vmatmul.f32.gmra.mxu0 %v487
  %v670 = vpop.f32.mrf.mxu0
  %v671 = vadd.f32 %v645, %v670
  %672 = vdwg.mxu0
  %673 = vmatpush.msra.mxu0 %v168
  %674 = vmatpush.msra.mxu0 %v167
  %675 = vmatpush.msra.mxu0 %v166
  %676 = vmatpush.msra.mxu0 %v165
  %677 = vmatpush.msra.mxu0 %v164
  %678 = vmatpush.msra.mxu0 %v163
  %679 = vmatpush.msra.mxu0 %v162
  %680 = vmatpush.msra.mxu0 %v161
  %681 = vmatpush.msra.mxu0 %v160
  %682 = vmatpush.msra.mxu0 %v159
  %683 = vmatpush.msra.mxu0 %v158
  %684 = vmatpush.msra.mxu0 %v157
  %685 = vmatpush.msra.mxu0 %v156
  %686 = vmatpush.msra.mxu0 %v155
  %687 = vmatpush.msra.mxu0 %v154
  %688 = vmatpush.msra.mxu0 %v153
  %689 = vmatmul.f32.gmra.mxu0 %v468
  %v690 = vpop.f32.mrf.mxu0
  %v691 = vadd.f32 %v665, %v690
  %692 = vmatmul.f32.gmra.mxu0 %v478
  %v693 = vpop.f32.mrf.mxu0
  %v694 = vadd.f32 %v668, %v693
  %695 = vmatmul.f32.gmra.mxu0 %v488
  %v696 = vpop.f32.mrf.mxu0
  %v697 = vadd.f32 %v671, %v696
  %698 = vdwg.mxu0
  %699 = vmatpush.msra.mxu0 %v184
  %700 = vmatpush.msra.mxu0 %v183
  %701 = vmatpush.msra.mxu0 %v182
  %702 = vmatpush.msra.mxu0 %v181
  %703 = vmatpush.msra.mxu0 %v180
  %704 = vmatpush.msra.mxu0 %v179
  %705 = vmatpush.msra.mxu0 %v178
  %706 = vmatpush.msra.mxu0 %v177
  %707 = vmatpush.msra.mxu0 %v176
  %708 = vmatpush.msra.mxu0 %v175
  %709 = vmatpush.msra.mxu0 %v174
  %710 = vmatpush.msra.mxu0 %v173
  %711 = vmatpush.msra.mxu0 %v172
  %712 = vmatpush.msra.mxu0 %v171
  %713 = vmatpush.msra.mxu0 %v170
  %714 = vmatpush.msra.mxu0 %v169
  %715 = vmatmul.f32.gmra.mxu0 %v469
  %v716 = vpop.f32.mrf.mxu0
  %v717 = vadd.f32 %v691, %v716
  %718 = vmatmul.f32.gmra.mxu0 %v479
  %v719 = vpop.f32.mrf.mxu0
  %v720 = vadd.f32 %v694, %v719
  %721 = vmatmul.f32.gmra.mxu0 %v489
  %v722 = vpop.f32.mrf.mxu0
  %v723 = vadd.f32 %v697, %v722
  %724 = vdwg.mxu0
  %725 = vmatpush.msra.mxu0 %v200
  %726 = vmatpush.msra.mxu0 %v199
  %727 = vmatpush.msra.mxu0 %v198
  %728 = vmatpush.msra.mxu0 %v197
  %729 = vmatpush.msra.mxu0 %v196
  %730 = vmatpush.msra.mxu0 %v195
  %731 = vmatpush.msra.mxu0 %v194
  %732 = vmatpush.msra.mxu0 %v193
  %733 = vmatpush.msra.mxu0 %v192
  %734 = vmatpush.msra.mxu0 %v191
  %735 = vmatpush.msra.mxu0 %v190
  %736 = vmatpush.msra.mxu0 %v189
  %737 = vmatpush.msra.mxu0 %v188
  %738 = vmatpush.msra.mxu0 %v187
  %739 = vmatpush.msra.mxu0 %v186
  %740 = vmatpush.msra.mxu0 %v185
  %741 = vmatmul.f32.gmra.mxu0 %v470
  %v742 = vpop.f32.mrf.mxu0
  %v743 = vadd.f32 %v717, %v742
  %744 = vmatmul.f32.gmra.mxu0 %v480
  %v745 = vpop.f32.mrf.mxu0
  %v746 = vadd.f32 %v720, %v745
  %747 = vmatmul.f32.gmra.mxu0 %v490
  %v748 = vpop.f32.mrf.mxu0
  %v749 = vadd.f32 %v723, %v748
  %750 = vdwg.mxu0
  %v751 = vmul.f32 %v453, 0.1
  %v752 = vmul.f32 %v456, 0.1
  %v753 = vmul.f32 %v459, 0.1
  %v754 = vmul.f32 %v743, 0.1
  %v755 = vmul.f32 %v746, 0.1
  %v756 = vmul.f32 %v749, 0.1
  %v757 = vmul.f32 %v751, %v751
  %v758 = vmul.f32 %v752, %v752
  %v759 = vmul.f32 %v753, %v753
  %v760 = vsub.f32 %v754, %v757
  %v761 = vsub.f32 %v755, %v758
  %v762 = vsub.f32 %v756, %v759
  %v763 = vmax.f32 %v760, 0.0
  %v764 = vmax.f32 %v761, 0.0
  %v765 = vmax.f32 %v762, 0.0
  %v766 = vadd.f32 %v763, %v764
  %vm767 = vcmask 1040384
  %v768 = vsel %vm767, %v765, 0.0
  %v769 = vadd.f32 %v766, %v768
  %v770 = vrot.slane %v769, 4
  %v771 = vadd.f32 %v769, %v770
  %v772 = vrot.slane %v771, 2
  %v773 = vadd.f32 %v771, %v772
  %v774 = vrot.slane %v773, 1
  %v775 = vadd.f32 %v773, %v774
  %v776 = vlaneseq
  %v777 = vshrl.u32 %v776, 7
  %vm778 = vcmp.eq.s32.totalorder %v777, 0
  %v779 = vsel %vm778, %v775, 0.0
  %780 = vst [vmem:[%s2] sm:$0xff] %v779
  // Predicated region
  $region10: #{my_loss.1} parent=0 // pred_check
    _
  $region11: #{my_loss.1} parent=0 // pred_check_branch
    %782 = sbr.rel (0) target = $region13
  $region12: #{my_loss.1} parent=0 // pred_region
    _
  $region13: #{my_loss.1} parent=0 // pred_fallthru
    _
  // Predicated region
  $region14: #{my_loss.1} parent=0 // pred_check
    _
  $region15: #{my_loss.1} parent=0 // pred_check_branch
    %784 = sbr.rel (0) target = $region17
  $region16: #{my_loss.1} parent=0 // pred_region
    _
  $region17: #{my_loss.1} parent=0 // pred_fallthru
    _

</llo_original>
